<compile_context>
chip_gen: v7x
topology: tpu7x:2x2x1
jax: 0.10.0
libtpu: 0.0.40
codegen_flags: <defaults>
</compile_context>

<pallas_src>
import functools

import jax
import jax.numpy as jnp
from jax.experimental import pallas as pl
from jax.experimental.pallas import tpu as pltpu


# Native-dtype byte cap for one x tile.  ~85% of the HBM roofline is already
# reached around 0.5-1 MiB tiles, so 2 MiB keeps us on the roofline while the
# f32 working set (below) stays far from v7x's 64 MiB physical VMEM.
_TILE_BYTES_CAP = 2 * 1024 * 1024
_MAX_TILE_ROWS = 1024
_MIN_GRID = 4                       # keep both v7x TensorCores busy + pipelining
_VMEM_LIMIT_BYTES = 48 * 1024 * 1024
_VMEM_HEADROOM_BYTES = 16 * 1024 * 1024


def layernorm_kernel(x_ref, wb_ref, o_ref, *, eps, inv_h, single_pass):
    x = x_ref[...].astype(jnp.float32)                    # (tile_rows, H) f32
    wb = wb_ref[...]                                      # (2, H) f32 (pre-cast)
    w = wb[0:1, :]
    b = wb[1:2, :]
    if single_pass:
        # One sweep over x: E[x] and E[x^2]; clamp guards cancellation.
        u = jnp.sum(x, axis=-1, keepdims=True) * inv_h
        ex2 = jnp.sum(x * x, axis=-1, keepdims=True) * inv_h
        var = jnp.maximum(ex2 - u * u, 0.0)
        inv_std = jax.lax.rsqrt(var + eps)                # EUP
        o_ref[...] = ((x - u) * inv_std * w + b).astype(o_ref.dtype)
    else:
        # Two-pass (numerically safest for inputs with large |mean|).
        u = jnp.sum(x, axis=-1, keepdims=True) * inv_h
        d = x - u
        var = jnp.sum(d * d, axis=-1, keepdims=True) * inv_h
        inv_std = jax.lax.rsqrt(var + eps)
        o_ref[...] = (d * inv_std * w + b).astype(o_ref.dtype)


def _pick_tile_rows(R, H, dtype):
    """Row tile honoring sublane packing, VMEM working set, and min grid."""
    itemsize = jnp.dtype(dtype).itemsize
    # Sublane packing quantum: f32 -> 8 rows, bf16 -> 16, int8/fp8 -> 32.
    row_quantum = max(8, 32 // max(itemsize, 1))
    if R <= row_quantum:
        return R  # single block == full row extent (always a legal block shape)

    # VMEM working-set model per tile row (bytes):
    #   double-buffered input + double-buffered output in the native dtype
    #   + ~2 full-width f32 intermediates (the upcast tile + one temp).
    bytes_per_row = H * (4 * itemsize + 2 * 4)
    budget = _VMEM_LIMIT_BYTES - _VMEM_HEADROOM_BYTES
    max_rows_vmem = budget // bytes_per_row
    if max_rows_vmem < row_quantum:
        # TODO(synk): for very wide H, chunk the hidden axis inside the kernel
        # (partial stats over H chunks) instead of emitting an oversized block.
        max_rows_vmem = row_quantum

    # Native-dtype tile cap (roofline already flat well below this).
    max_rows_cap = max(row_quantum, _TILE_BYTES_CAP // max(H * itemsize, 1))

    # Keep the grid at least ~_MIN_GRID steps so megacore sharding and
    # prefetch/writeback overlap have something to work with.
    max_rows_grid = (pl.cdiv(R, _MIN_GRID) // row_quantum) * row_quantum
    if max_rows_grid == 0:
        max_rows_grid = row_quantum

    tile = min(max_rows_vmem, max_rows_cap, max_rows_grid, _MAX_TILE_ROWS)
    tile = max(row_quantum, (tile // row_quantum) * row_quantum)
    if tile >= R:
        return R
    return tile


def layer_norm(x, weight, bias, eps=1e-05, tile_rows=None, single_pass_stats=True):
    """x: (..., H). weight/bias: (H,). Returns same shape/dtype as x."""
    orig_shape = x.shape
    H = orig_shape[-1]
    x2 = x.reshape(-1, H)
    R = x2.shape[0]

    if tile_rows is None:
        tile_rows = _pick_tile_rows(R, H, x.dtype)

    # Fuse weight & bias into one pre-cast f32 (2, H) operand: single constant
    # -index DMA stream, no per-step casts inside the kernel.
    wb = jnp.stack(
        [weight.astype(jnp.float32), bias.astype(jnp.float32)], axis=0
    )  # (2, H)

    # No row padding / output slicing: a partial last block's out-of-range rows
    # compute junk independently per row and their writes are dropped.
    grid = (pl.cdiv(R, tile_rows),)

    # Note: for H < 128 (toy sizes) output stores are lane-masked; real
    # transformer hidden sizes (multiples of 128) are lane-dense already.
    # TODO(synk): optional bf16 elementwise tail on v6e/v7x (keep stats in f32)
    # and pipeline_mode=pl.Buffered(3) on the x input for very small tiles.
    kernel = functools.partial(
        layernorm_kernel,
        eps=float(eps),
        inv_h=1.0 / H,
        single_pass=bool(single_pass_stats),
    )

    out = pl.pallas_call(
        kernel,
        out_shape=jax.ShapeDtypeStruct((R, H), x.dtype),
        grid_spec=pltpu.PrefetchScalarGridSpec(
            num_scalar_prefetch=0,
            grid=grid,
            in_specs=[
                pl.BlockSpec((tile_rows, H), lambda i: (i, 0)),
                # weight+bias: constant block index -> fetched once.
                pl.BlockSpec((2, H), lambda i: (0, 0)),
            ],
            out_specs=pl.BlockSpec((tile_rows, H), lambda i: (i, 0)),
        ),
        compiler_params=pltpu.CompilerParams(
            dimension_semantics=("parallel",),
            vmem_limit_bytes=_VMEM_LIMIT_BYTES,
        ),
    )(x2, wb)

    return out.reshape(orig_shape)


def layer_norm_ref(x, weight, bias, eps=1e-05):
    xf = x.astype(jnp.float32)
    u = jnp.mean(xf, axis=-1, keepdims=True)
    s = jnp.mean((xf - u) ** 2, axis=-1, keepdims=True)
    y = (xf - u) / jnp.sqrt(s + eps)
    return (weight * y + bias).astype(x.dtype)


if __name__ == "__main__":
    key = jax.random.PRNGKey(0)
    batch, seq, hidden = 2, 8, 32

    kx, kw, kb = jax.random.split(key, 3)
    x = jax.random.normal(kx, (batch, seq, hidden), dtype=jnp.float32)
    # Torch init is ones/zeros; perturb slightly so the affine part is exercised.
    weight = jnp.ones((hidden,), jnp.float32) + 0.01 * jax.random.normal(kw, (hidden,))
    bias = jnp.zeros((hidden,), jnp.float32) + 0.01 * jax.random.normal(kb, (hidden,))

    out = layer_norm(x, weight, bias)
    jax.block_until_ready(out)

    ref = layer_norm_ref(x, weight, bias)
    assert out.shape == x.shape and out.dtype == x.dtype
    assert jnp.allclose(out, ref, atol=1e-5, rtol=1e-5)

    # Also exercise the two-pass fallback path once for coverage.
    out2 = layer_norm(x, weight, bias, single_pass_stats=False)
    jax.block_until_ready(out2)
    assert jnp.allclose(out2, ref, atol=1e-5, rtol=1e-5)

    print("KERNEL_OK")
</pallas_src>

<mosaic_0001>
module attributes {stable_mosaic.version = 11 : i64} {
  func.func @layernorm_kernel(%arg0: i32, %arg1: memref<8x32xf32, #tpu.memory_space<vmem>>, %arg2: memref<2x32xf32, #tpu.memory_space<vmem>>, %arg3: memref<8x32xf32, #tpu.memory_space<vmem>>) attributes {dimension_semantics = [#tpu.dimension_semantics<parallel>], iteration_bounds = array<i64: 2>, scalar_prefetch = 0 : i64, scratch_operands = 0 : i64, tpu.core_type = #tpu.core_type<tc>, window_params = [{transform_indices = @transform_0, window_bounds = array<i64: 8, 32>}, {pipeline_mode = #tpu.pipeline_mode<synchronous>, transform_indices = @transform_1, window_bounds = array<i64: 2, 32>}, {transform_indices = @transform_2, window_bounds = array<i64: 8, 32>}]} {
    %c0 = arith.constant 0 : index
    %c0_0 = arith.constant 0 : index
    %0 = vector.load %arg1[%c0, %c0_0] : memref<8x32xf32, #tpu.memory_space<vmem>>, vector<8x32xf32>
    %c0_1 = arith.constant 0 : index
    %c0_2 = arith.constant 0 : index
    %1 = vector.load %arg2[%c0_1, %c0_2] : memref<2x32xf32, #tpu.memory_space<vmem>>, vector<2x32xf32>
    %2 = vector.extract_strided_slice %1 {offsets = [0, 0], sizes = [1, 32], strides = [1, 1]} : vector<2x32xf32> to vector<1x32xf32>
    %3 = vector.extract_strided_slice %1 {offsets = [1, 0], sizes = [1, 32], strides = [1, 1]} : vector<2x32xf32> to vector<1x32xf32>
    %cst = arith.constant dense<0.000000e+00> : vector<8xf32>
    %4 = vector.multi_reduction <add>, %0, %cst [1] : vector<8x32xf32> to vector<8xf32>
    %5 = vector.shape_cast %4 : vector<8xf32> to vector<8x1xf32>
    %cst_3 = arith.constant 3.125000e-02 : f32
    %6 = vector.broadcast %cst_3 : f32 to vector<8x1xf32>
    %7 = arith.mulf %5, %6 : vector<8x1xf32>
    %8 = arith.mulf %0, %0 : vector<8x32xf32>
    %cst_4 = arith.constant dense<0.000000e+00> : vector<8xf32>
    %9 = vector.multi_reduction <add>, %8, %cst_4 [1] : vector<8x32xf32> to vector<8xf32>
    %10 = vector.shape_cast %9 : vector<8xf32> to vector<8x1xf32>
    %cst_5 = arith.constant 3.125000e-02 : f32
    %11 = vector.broadcast %cst_5 : f32 to vector<8x1xf32>
    %12 = arith.mulf %10, %11 : vector<8x1xf32>
    %13 = arith.mulf %7, %7 : vector<8x1xf32>
    %14 = arith.subf %12, %13 : vector<8x1xf32>
    %cst_6 = arith.constant 0.000000e+00 : f32
    %15 = vector.broadcast %cst_6 : f32 to vector<8x1xf32>
    %16 = arith.maximumf %14, %15 : vector<8x1xf32>
    %cst_7 = arith.constant 9.99999974E-6 : f32
    %17 = vector.broadcast %cst_7 : f32 to vector<8x1xf32>
    %18 = arith.addf %16, %17 : vector<8x1xf32>
    %19 = math.rsqrt %18 : vector<8x1xf32>
    %20 = vector.broadcast %7 : vector<8x1xf32> to vector<8x32xf32>
    %21 = arith.subf %0, %20 : vector<8x32xf32>
    %22 = vector.broadcast %19 : vector<8x1xf32> to vector<8x32xf32>
    %23 = arith.mulf %21, %22 : vector<8x32xf32>
    %24 = vector.broadcast %2 : vector<1x32xf32> to vector<8x32xf32>
    %25 = arith.mulf %23, %24 : vector<8x32xf32>
    %26 = vector.broadcast %3 : vector<1x32xf32> to vector<8x32xf32>
    %27 = arith.addf %25, %26 : vector<8x32xf32>
    %c0_8 = arith.constant 0 : index
    %c0_9 = arith.constant 0 : index
    %28 = vector.load %arg3[%c0_8, %c0_9] : memref<8x32xf32, #tpu.memory_space<vmem>>, vector<8x32xf32>
    tpu.vector_store %arg3[%c0_8, %c0_9], %27 {strides = array<i32>} : memref<8x32xf32, #tpu.memory_space<vmem>>, vector<8x32xf32>,
    return
  }
  func.func @transform_0(%arg0: i32) -> (i32, i32) {
    %c0_i32 = arith.constant 0 : i32
    %c0_i32_0 = arith.constant 0 : i32
    return %arg0, %c0_i32 : i32, i32
  }
  func.func @transform_1(%arg0: i32) -> (i32, i32) {
    %c0_i32 = arith.constant 0 : i32
    %c0_i32_0 = arith.constant 0 : i32
    %c0_i32_1 = arith.constant 0 : i32
    return %c0_i32, %c0_i32_0 : i32, i32
  }
  func.func @transform_2(%arg0: i32) -> (i32, i32) {
    %c0_i32 = arith.constant 0 : i32
    %c0_i32_0 = arith.constant 0 : i32
    return %arg0, %c0_i32 : i32, i32
  }
}

</mosaic_0001>

<llo_original>
// kernel: tpu_custom_call.1
$region0: #{tpu_custom_call.1}
  #allocation0 [shape = 'u32[]', space=smem, size = 0x4, offset = 0x4, fixed_abs, tag = 'smem constant byte address 0x4 - core index']
  #allocation1 [shape = 'u32[144,128]{1,0:T(1,128)}', space=vmem, size = 0x12000, scoped, tag = 'internal scratch']
  %s0 = inlined_call_operand.hbm [shape: f32[16,32], index: 0, kind: input, shape index: {}]
  %s1 = inlined_call_operand.vmem [shape: f32[2,32], index: 1, kind: input, shape index: {}]
  %s2 = inlined_call_operand.hbm [shape: f32[16,32], index: 2, kind: output, shape index: {}]
  %s3 = sld [smem:[#allocation0]]
  $region45: #{tpu_custom_call.1} parent=0
    _
  %s5 = ssub.s32 1, %s3
  %s6 = scalar_select 0, %s5, %s3
  $region1: #{tpu_custom_call.1} parent=0
    #allocation2 [shape = 'u8[8192]{0}', space=vmem, size = 0x2000, scoped, tag = 'input window, operand 0']
    #allocation3 [shape = 's32[2]{0}', space=sflag, size = 0x8, scoped, tag = 'scoped memory for tpu_custom_call.1']
    #allocation4 [shape = 's32[2]{0}', space=sflag, size = 0x8, scoped, tag = 'scoped memory for tpu_custom_call.1']
    #allocation5 [shape = 'u8[8192]{0}', space=vmem, size = 0x2000, scoped, tag = 'output window, operand 0']
    %7 = vsyncpa [#allocation3], 0
    %s8 = scalar_lea.sflag [#allocation3], 1
    %9 = vsyncpa %s8, 0
    %10 = vsyncpa [#allocation4], 0
    %s11 = scalar_lea.sflag [#allocation4], 1
    %12 = vsyncpa %s11, 0
    loop: start=0, step=1, limit=4
    $region2: #{tpu_custom_call.1} parent=1 // loop_pre_header
      _
    $region3: #{tpu_custom_call.1} parent=1 // loop_header
      %s14 = sphi 0, %s18
      %p15 = scmp.ge.s32.totalorder %s14, 4
      %s24 = sphi 0, %s26
      %s27 = sphi 0, %s24
      %s28 = sphi 0, %s27
      %s44 = sphi 0, %s28
      %s48 = sphi 0, %s48
      %s50 = sphi 0, %s48
      %s51 = sphi 0, %s50
      %s65 = sphi 0, %s51
      %s71 = sphi 0, %s73
      %s74 = sphi 0, %s71
      %s75 = sphi 0, %s74
      %s91 = sphi 0, %s75
    $region4: #{tpu_custom_call.1} parent=1 // loop_header_branch
      %17 = sbr.rel (%p15) target = $region8
    $region5: #{tpu_custom_call.1} parent=1 // loop_body
      %s19 = ssub.s32 %s14, 1
      %s20 = ssub.s32 %s14, 2
      %s21 = sadd.s32 %s14, 1
      %s22 = ssub.s32 %s14, %s21
      %p23 = scmp.eq.s32.totalorder %s22, 0
      %s25 = sadd.s32 %s24, 1
      %s26 = scalar_select %p23, %s24, %s25
      %p29 = pneg %p23
      %p30 = scmp.eq.s32.totalorder %s14, 1
      %p31 = por %p29, %p30
      %p32 = scmp.ne.s32.totalorder %s24, %s27
      %p33 = scmp.eq.s32.totalorder %s14, 0
      %p34 = por %p32, %p33
      %p35 = scmp.ne.s32.totalorder %s24, %s27
      %p36 = scmp.eq.s32.totalorder %s19, 1
      %p37 = por %p35, %p36
      %p38 = scmp.ne.s32.totalorder %s27, %s28
      %p39 = scmp.eq.s32.totalorder %s19, 0
      %p40 = por %p38, %p39
      %p41 = scmp.ne.s32.totalorder %s27, %s28
      %p42 = scmp.eq.s32.totalorder %s20, 1
      %p43 = por %p41, %p42
      %p45 = scmp.ne.s32.totalorder %s28, %s44
      %p46 = scmp.eq.s32.totalorder %s20, 0
      %p47 = por %p45, %p46
      %s49 = sadd.s32 %s48, 1
      %p52 = scmp.eq.s32.totalorder %s14, 1
      %p53 = scmp.ne.s32.totalorder %s48, %s50
      %p54 = scmp.eq.s32.totalorder %s14, 0
      %p55 = por %p53, %p54
      %p56 = scmp.ne.s32.totalorder %s48, %s50
      %p57 = scmp.eq.s32.totalorder %s19, 1
      %p58 = por %p56, %p57
      %p59 = scmp.ne.s32.totalorder %s50, %s51
      %p60 = scmp.eq.s32.totalorder %s19, 0
      %p61 = por %p59, %p60
      %p62 = scmp.ne.s32.totalorder %s50, %s51
      %p63 = scmp.eq.s32.totalorder %s20, 1
      %p64 = por %p62, %p63
      %p66 = scmp.ne.s32.totalorder %s51, %s65
      %p67 = scmp.eq.s32.totalorder %s20, 0
      %p68 = por %p66, %p67
      %s69 = ssub.s32 %s14, %s21
      %p70 = scmp.eq.s32.totalorder %s69, 0
      %s72 = sadd.s32 %s71, 1
      %s73 = scalar_select %p70, %s71, %s72
      %p76 = pneg %p70
      %p77 = scmp.eq.s32.totalorder %s14, 1
      %p78 = por %p76, %p77
      %p79 = scmp.ne.s32.totalorder %s71, %s74
      %p80 = scmp.eq.s32.totalorder %s14, 0
      %p81 = por %p79, %p80
      %p82 = scmp.ne.s32.totalorder %s71, %s74
      %p83 = scmp.eq.s32.totalorder %s19, 1
      %p84 = por %p82, %p83
      %p85 = scmp.ne.s32.totalorder %s74, %s75
      %p86 = scmp.eq.s32.totalorder %s19, 0
      %p87 = por %p85, %p86
      %p88 = scmp.ne.s32.totalorder %s74, %s75
      %p89 = scmp.eq.s32.totalorder %s20, 1
      %p90 = por %p88, %p89
      %p92 = scmp.ne.s32.totalorder %s75, %s91
      %p93 = scmp.eq.s32.totalorder %s20, 0
      %p94 = por %p92, %p93
      %p95 = scmp.le.s32.totalorder 1, %s14
      %p96 = scmp.lt.s32.totalorder %s14, 3
      %p97 = pnand %p95, %p96
      %p98 = pneg %p97
      // Predicated region
      $region9: #{tpu_custom_call.1} parent=5 // pred_check
        _
      $region10: #{tpu_custom_call.1} parent=5 // pred_check_branch
        %100 = sbr.rel (%p97) target = $region12
      $region11: #{tpu_custom_call.1} parent=5 // pred_region
        %s101 = ssub.s32 %s14, 1
        // Predicated region
        $region13: #{tpu_custom_call.1} parent=11 // pred_check
          %p102 = pneg %p61
        $region14: #{tpu_custom_call.1} parent=11 // pred_check_branch
          %104 = sbr.rel (%p102) target = $region16
        $region15: #{tpu_custom_call.1} parent=11 // pred_region
          _
        $region16: #{tpu_custom_call.1} parent=11 // pred_fallthru
          _
      $region12: #{tpu_custom_call.1} parent=5 // pred_fallthru
        _
      %p105 = scmp.lt.s32.totalorder %s14, 2
      // Predicated region
      $region17: #{tpu_custom_call.1} parent=5 // pred_check
        %p106 = pneg %p105
      $region18: #{tpu_custom_call.1} parent=5 // pred_check_branch
        %108 = sbr.rel (%p106) target = $region20
      $region19: #{tpu_custom_call.1} parent=5 // pred_region
        // Predicated region
        $region21: #{tpu_custom_call.1} parent=19 // pred_check
          %p109 = pneg %p34
        $region22: #{tpu_custom_call.1} parent=19 // pred_check_branch
          %111 = sbr.rel (%p109) target = $region24
        $region23: #{tpu_custom_call.1} parent=19 // pred_region
          %s112 = sand.u32 %s24, 1
          %s113 = scalar_lea.sflag [#allocation3], %s112
          %s114 = sand.u32 %s24, 1
          %s115 = smul.addr %s114, 8
          %s116 = scalar_lea.vmem [#allocation2], %s115
          %s118 = ssub.s32 128, 128
          %119 = vsyncadd %s113, %s118
          %s120 = smul.addr %s14, 128
          %s121 = scalar_lea.hbm %s0, %s120
          %s123 = sshll.u32 %s116, 4
          %s124 = int_to_ptr.vmem [resolvable:$true] %s123
          %126 = dma.hbm_to_vmem [thread:$0]  %s121, 128, %s124, %s113
        $region24: #{tpu_custom_call.1} parent=19 // pred_fallthru
          _
      $region20: #{tpu_custom_call.1} parent=5 // pred_fallthru
        _
      %p127 = scmp.le.s32.totalorder 1, %s14
      %p128 = scmp.lt.s32.totalorder %s14, 3
      %p129 = pnand %p127, %p128
      %p130 = pneg %p129
      // Predicated region
      $region25: #{tpu_custom_call.1} parent=5 // pred_check
        _
      $region26: #{tpu_custom_call.1} parent=5 // pred_check_branch
        %132 = sbr.rel (%p129) target = $region28
      $region27: #{tpu_custom_call.1} parent=5 // pred_region
        %s133 = ssub.s32 %s14, 1
        %s134 = sand.u32 %s27, 1
        %s135 = scalar_lea.sflag [#allocation3], %s134
        %s136 = sand.u32 %s27, 1
        %s137 = smul.addr %s136, 8
        %s138 = scalar_lea.vmem [#allocation2], %s137
        // Predicated region
        $region29: #{tpu_custom_call.1} parent=27 // pred_check
          %p139 = pneg %p40
        $region30: #{tpu_custom_call.1} parent=27 // pred_check_branch
          %141 = sbr.rel (%p139) target = $region32
        $region31: #{tpu_custom_call.1} parent=27 // pred_region
          %142 = dma.done %s135, 128
        $region32: #{tpu_custom_call.1} parent=27 // pred_fallthru
          _
        %s143 = sand.u32 %s27, 1
        %s144 = scalar_lea.sflag [#allocation3], %s143
        %s145 = sand.u32 %s27, 1
        %s146 = smul.addr %s145, 8
        %s147 = scalar_lea.vmem [#allocation2], %s146
        %p148 = pneg %p40
        %p149 = pneg %p37
        %p150 = pneg %p61
        %p151 = pneg %p58
        %p152 = pneg %p87
        %p153 = pneg %p84
        %s154 = sand.u32 %s74, 1
        %s155 = scalar_lea.sflag [#allocation4], %s154
        %s156 = sand.u32 %s74, 1
        %s157 = smul.addr %s156, 8
        %s158 = scalar_lea.vmem [#allocation5], %s157
        %v159 = vld [vmem:[%s138] sm:$0xff]
        %v160 = vld [vmem:[%s1] sm:$0x3]
        %vm161 = vcmask 261120
        %v162 = vsel %vm161, %v159, 0.0
        %163 = vadd.xlane.f32.xlu0 %v162
        %v164 = vpop.xlane.xlu0 %163
        %v165 = vmul.f32 %v164, 0.03125
        %v166 = vmul.f32 %v159, %v159
        %v167 = vsel %vm161, %v166, 0.0
        %168 = vadd.xlane.f32.xlu0 %v167
        %v169 = vpop.xlane.xlu0 %168
        %v170 = vmul.f32 %v169, 0.03125
        %v171 = vmul.f32 %v165, %v165
        %v172 = vsub.f32 %v170, %v171
        %v173 = vmax.f32 %v172, 0.0
        %v174 = vadd.f32 %v173, 1e-05
        %v175 = vrsqrt.pop %v174
        %v176 = vsub.f32 %v159, %v165
        %v177 = vmul.f32 %v176, %v175
        %v178 = vlaneseq
        %v179 = vshrl.u32 %v178, 7
        %v180 = vsub.s32 0, %v179
        %v181 = vrot.slane %v160, %v180
        %v182 = vmul.f32 %v177, %v181
        %v183 = vlaneseq
        %v184 = vshrl.u32 %v183, 7
        %v185 = vsub.s32 1, %v184
        %v186 = vrot.slane %v160, %v185
        %v187 = vadd.f32 %v182, %v186
        %188 = vst.msk [vmem:[%s158] sm:$0xff] %vm161, %v187
        %s189 = sand.u32 %s74, 1
        %s190 = scalar_lea.sflag [#allocation4], %s189
        %s191 = sand.u32 %s74, 1
        %s192 = smul.addr %s191, 8
        %s193 = scalar_lea.vmem [#allocation5], %s192
        // Predicated region
        $region33: #{tpu_custom_call.1} parent=27 // pred_check
          %p194 = pneg %p84
        $region34: #{tpu_custom_call.1} parent=27 // pred_check_branch
          %196 = sbr.rel (%p194) target = $region36
        $region35: #{tpu_custom_call.1} parent=27 // pred_region
          %s198 = ssub.s32 128, 128
          %199 = vsyncadd %s190, %s198
          %s200 = smul.addr %s19, 128
          %s201 = scalar_lea.hbm %s2, %s200
          %s203 = sshll.u32 %s193, 4
          %s204 = int_to_ptr.vmem [resolvable:$true] %s203
          %206 = dma.vmem_to_hbm [thread:$0]  %s204, 128, %s201, %s190
        $region36: #{tpu_custom_call.1} parent=27 // pred_fallthru
          _
      $region28: #{tpu_custom_call.1} parent=5 // pred_fallthru
        _
      %p207 = scmp.le.s32.totalorder 2, %s14
      // Predicated region
      $region37: #{tpu_custom_call.1} parent=5 // pred_check
        %p208 = pneg %p207
      $region38: #{tpu_custom_call.1} parent=5 // pred_check_branch
        %210 = sbr.rel (%p208) target = $region40
      $region39: #{tpu_custom_call.1} parent=5 // pred_region
        %s211 = ssub.s32 %s14, 2
        // Predicated region
        $region41: #{tpu_custom_call.1} parent=39 // pred_check
          %p212 = pneg %p90
        $region42: #{tpu_custom_call.1} parent=39 // pred_check_branch
          %214 = sbr.rel (%p212) target = $region44
        $region43: #{tpu_custom_call.1} parent=39 // pred_region
          %s215 = sand.u32 %s75, 1
          %s216 = scalar_lea.sflag [#allocation4], %s215
          %s217 = sand.u32 %s75, 1
          %s218 = smul.addr %s217, 8
          %s219 = scalar_lea.vmem [#allocation5], %s218
          %220 = dma.done %s216, 128
        $region44: #{tpu_custom_call.1} parent=39 // pred_fallthru
          _
      $region40: #{tpu_custom_call.1} parent=5 // pred_fallthru
        _
    $region6: #{tpu_custom_call.1} parent=1 // loop_footer
      %s18 = sadd.s32 1, %s14
    $region7: #{tpu_custom_call.1} parent=1 // loop_footer_branch
      %13 = sbr.rel target = $region3
    $region8: #{tpu_custom_call.1} parent=1 // loop_exit
      _
    %221 = vsyncpa [#allocation3], 1
    %s222 = scalar_lea.sflag [#allocation3], 1
    %223 = vsyncpa %s222, 1
    %224 = vsyncpa [#allocation4], 1
    %s225 = scalar_lea.sflag [#allocation4], 1
    %226 = vsyncpa %s225, 1

</llo_original>
